<compile_context>
chip_gen: v7x
topology: tpu7x:2x2x1
jax: 0.10.0
libtpu: 0.0.40
codegen_flags: <defaults>
</compile_context>

<pallas_src>
import functools

import jax
import jax.numpy as jnp
from jax.experimental import pallas as pl
from jax.experimental.pallas import tpu as pltpu

_LANE = 128       # vreg / MXU lane width
_SUBLANE_BF16 = 16  # bf16 sublane packing


def _round_up(n, m):
    return ((n + m - 1) // m) * m


def _batch_tiling(B, tile_b):
    """Balanced batch tiling: tile size (multiple of 16) and padded batch."""
    n_tiles = max(1, -(-B // max(tile_b, _SUBLANE_BF16)))
    # v7x has 2 TensorCores and shards "parallel" grid axes across them; keep
    # at least two grid steps when the batch is big enough to split.
    if n_tiles == 1 and B >= 256:
        n_tiles = 2
    TB = _round_up(-(-B // n_tiles), _SUBLANE_BF16)
    B_p = _round_up(B, TB)
    return TB, B_p


def _bc_agent_kernel(x_ref, w1_ref, b1_ref, w2_ref, b2_ref, w3_ref, b3_ref,
                     o_ref):
    # f32 -> bf16 cast of the batch tile on the VPU (free; kernel is DMA-bound).
    x = x_ref[...].astype(jnp.bfloat16)
    # Layer 1: Linear (bf16 MXU, f32 accumulate) + bias + ReLU
    h1 = jnp.dot(x, w1_ref[...], preferred_element_type=jnp.float32)
    h1 = jnp.maximum(h1 + b1_ref[...], 0.0).astype(jnp.bfloat16)
    # Layer 2: Linear + bias + ReLU
    h2 = jnp.dot(h1, w2_ref[...], preferred_element_type=jnp.float32)
    h2 = jnp.maximum(h2 + b2_ref[...], 0.0).astype(jnp.bfloat16)
    # Layer 3: Linear (action head, no activation)
    out = jnp.dot(h2, w3_ref[...], preferred_element_type=jnp.float32)
    o_ref[...] = (out + b3_ref[...]).astype(o_ref.dtype)


def prepare_params(params):
    """One-time weight prep: pad hidden dim to 128 lanes and cast to bf16.

    Input params are PyTorch-convention-free: w stored as (in, out), b as
    (1, out), so the kernel computes x @ W + b (== x @ W_pt.T + b_pt).
    Padding is mathematically exact: padded hidden columns get zero weights
    and zero bias, so they stay zero through ReLU and contribute nothing.
    The action dim is intentionally left unpadded.
    """
    w1, b1 = params["w1"], params["b1"]
    w2, b2 = params["w2"], params["b2"]
    w3, b3 = params["w3"], params["b3"]

    obs, hid = w1.shape
    act = w3.shape[1]
    hid_p = _round_up(hid, _LANE)

    bf16, f32 = jnp.bfloat16, jnp.float32
    w1p = jnp.zeros((obs, hid_p), bf16).at[:, :hid].set(w1.astype(bf16))
    b1p = jnp.zeros((1, hid_p), f32).at[:, :hid].set(b1.astype(f32))
    w2p = jnp.zeros((hid_p, hid_p), bf16).at[:hid, :hid].set(w2.astype(bf16))
    b2p = jnp.zeros((1, hid_p), f32).at[:, :hid].set(b2.astype(f32))
    w3p = jnp.zeros((hid_p, act), bf16).at[:hid, :].set(w3.astype(bf16))
    b3p = b3.astype(f32)
    return {"w1": w1p, "b1": b1p, "w2": w2p, "b2": b2p, "w3": w3p, "b3": b3p}


@functools.partial(jax.jit, static_argnames=("tile_b",))
def bc_agent_forward(x, prepared, *, tile_b=2048):
    """Fused MLP agent forward pass.

    x: (B, obs_dim) float32
    prepared: output of prepare_params() (bf16 weights, f32 biases, hidden dim
              padded to a multiple of 128, action dim unpadded).
    Returns (B, act_dim) float32.
    """
    w1, b1 = prepared["w1"], prepared["b1"]
    w2, b2 = prepared["w2"], prepared["b2"]
    w3, b3 = prepared["w3"], prepared["b3"]

    B, obs = x.shape
    hid_p = w1.shape[1]
    act = w3.shape[1]

    TB, B_p = _batch_tiling(B, tile_b)
    # Pad the batch axis only when needed (no feature-dim padding of x).
    if B_p != B:
        x = jnp.pad(x, ((0, B_p - B), (0, 0)))

    grid = (B_p // TB,)

    def resident(a):  # full-array block, stays in VMEM across grid steps
        return pl.BlockSpec(a.shape, lambda i: (0,) * a.ndim)

    flops = 2 * B_p * (obs * hid_p + hid_p * hid_p + hid_p * act)
    bytes_accessed = (
        B_p * obs * 4                                   # x (f32)
        + (w1.size + w2.size + w3.size) * 2             # weights (bf16)
        + (b1.size + b2.size + b3.size) * 4             # biases (f32)
        + B_p * act * 4                                 # out (f32)
    )

    out = pl.pallas_call(
        _bc_agent_kernel,
        out_shape=jax.ShapeDtypeStruct((B_p, act), jnp.float32),
        grid=grid,
        in_specs=[
            pl.BlockSpec((TB, obs), lambda i: (i, 0)),   # x: batch-tiled
            resident(w1), resident(b1),
            resident(w2), resident(b2),
            resident(w3), resident(b3),
        ],
        out_specs=pl.BlockSpec((TB, act), lambda i: (i, 0)),
        compiler_params=pltpu.CompilerParams(
            dimension_semantics=("parallel",)),
        cost_estimate=pl.CostEstimate(
            flops=flops, transcendentals=0, bytes_accessed=bytes_accessed),
    )(x, w1, b1, w2, b2, w3, b3)

    if B_p != B:
        out = out[:B]
    return out


def init_agent_params(key, obs_dim, hidden, act_dim):
    """Deterministic parameter init (PyTorch nn.Linear-style uniform)."""
    ks = jax.random.split(key, 6)

    def linear(kw, kb, fan_in, fan_out):
        bound = 1.0 / jnp.sqrt(fan_in)
        # Stored as (in, out) so the kernel computes x @ W directly.
        w = jax.random.uniform(kw, (fan_in, fan_out), jnp.float32,
                               minval=-bound, maxval=bound)
        b = jax.random.uniform(kb, (1, fan_out), jnp.float32,
                               minval=-bound, maxval=bound)
        return w, b

    w1, b1 = linear(ks[0], ks[1], obs_dim, hidden)
    w2, b2 = linear(ks[2], ks[3], hidden, hidden)
    w3, b3 = linear(ks[4], ks[5], hidden, act_dim)
    return {"w1": w1, "b1": b1, "w2": w2, "b2": b2, "w3": w3, "b3": b3}


def reference_forward(x, params):
    """Pure-JAX reference mirroring the kernel's bf16-in / f32-accumulate."""
    bf16 = jnp.bfloat16
    h1 = jnp.dot(x.astype(bf16), params["w1"].astype(bf16),
                 preferred_element_type=jnp.float32)
    h1 = jnp.maximum(h1 + params["b1"], 0.0)
    h2 = jnp.dot(h1.astype(bf16), params["w2"].astype(bf16),
                 preferred_element_type=jnp.float32)
    h2 = jnp.maximum(h2 + params["b2"], 0.0)
    out = jnp.dot(h2.astype(bf16), params["w3"].astype(bf16),
                  preferred_element_type=jnp.float32)
    return out + params["b3"]


if __name__ == "__main__":
    key = jax.random.PRNGKey(0)
    k_x, k_p, k_x2 = jax.random.split(key, 3)

    B, OBS, HID, ACT = 8, 32, 64, 8
    params = init_agent_params(k_p, OBS, HID, ACT)
    prepared = prepare_params(params)   # one-time weight pad + bf16 cast

    # Small batch: single grid step after 16-row padding.
    x = jax.random.normal(k_x, (B, OBS), jnp.float32)
    out = jax.block_until_ready(bc_agent_forward(x, prepared))
    ref = reference_forward(x, params)
    assert out.shape == (B, ACT), out.shape
    assert jnp.allclose(out, ref, atol=1e-2, rtol=1e-2), "mismatch (small batch)"

    # Larger ragged batch exercises multi-step grid + batch padding.
    B2 = 300
    x2 = jax.random.normal(k_x2, (B2, OBS), jnp.float32)
    out2 = jax.block_until_ready(bc_agent_forward(x2, prepared, tile_b=128))
    ref2 = reference_forward(x2, params)
    assert out2.shape == (B2, ACT), out2.shape
    assert jnp.allclose(out2, ref2, atol=1e-2, rtol=1e-2), "mismatch (ragged batch)"

    # Default (large-tile) path on the ragged batch: forced 2 grid steps (v7x).
    out3 = jax.block_until_ready(bc_agent_forward(x2, prepared))
    assert jnp.allclose(out3, ref2, atol=1e-2, rtol=1e-2), "mismatch (default tile)"

    print("KERNEL_OK")
</pallas_src>

<mosaic_0001>
module attributes {stable_mosaic.version = 11 : i64} {
  func.func @_bc_agent_kernel(%arg0: i32, %arg1: memref<16x32xf32, #tpu.memory_space<vmem>>, %arg2: memref<32x128xbf16, #tpu.memory_space<vmem>>, %arg3: memref<1x128xf32, #tpu.memory_space<vmem>>, %arg4: memref<128x128xbf16, #tpu.memory_space<vmem>>, %arg5: memref<1x128xf32, #tpu.memory_space<vmem>>, %arg6: memref<128x8xbf16, #tpu.memory_space<vmem>>, %arg7: memref<1x8xf32, #tpu.memory_space<vmem>>, %arg8: memref<16x8xf32, #tpu.memory_space<vmem>>) attributes {dimension_semantics = [#tpu.dimension_semantics<parallel>], iteration_bounds = array<i64: 1>, scalar_prefetch = 0 : i64, scratch_operands = 0 : i64, tpu.core_type = #tpu.core_type<tc>, window_params = [{transform_indices = @transform_0, window_bounds = array<i64: 16, 32>}, {pipeline_mode = #tpu.pipeline_mode<synchronous>, transform_indices = @transform_1, window_bounds = array<i64: 32, 128>}, {pipeline_mode = #tpu.pipeline_mode<synchronous>, transform_indices = @transform_2, window_bounds = array<i64: 1, 128>}, {pipeline_mode = #tpu.pipeline_mode<synchronous>, transform_indices = @transform_3, window_bounds = array<i64: 128, 128>}, {pipeline_mode = #tpu.pipeline_mode<synchronous>, transform_indices = @transform_4, window_bounds = array<i64: 1, 128>}, {pipeline_mode = #tpu.pipeline_mode<synchronous>, transform_indices = @transform_5, window_bounds = array<i64: 128, 8>}, {pipeline_mode = #tpu.pipeline_mode<synchronous>, transform_indices = @transform_6, window_bounds = array<i64: 1, 8>}, {transform_indices = @transform_7, window_bounds = array<i64: 16, 8>}]} {
    %c0 = arith.constant 0 : index
    %c0_0 = arith.constant 0 : index
    %0 = vector.load %arg1[%c0, %c0_0] : memref<16x32xf32, #tpu.memory_space<vmem>>, vector<16x32xf32>
    %1 = arith.truncf %0 : vector<16x32xf32> to vector<16x32xbf16>
    %c0_1 = arith.constant 0 : index
    %c0_2 = arith.constant 0 : index
    %2 = vector.load %arg2[%c0_1, %c0_2] : memref<32x128xbf16, #tpu.memory_space<vmem>>, vector<32x128xbf16>
    %cst = arith.constant dense<0.000000e+00> : vector<16x128xf32>
    %3 = tpu.matmul %1, %2, %cst {dimension_numbers = #tpu.dot_dimension_numbers<[1], [0], [0], [1], [0, 0, 1, 1], [], []>} : vector<16x32xbf16>, vector<32x128xbf16>, vector<16x128xf32> -> vector<16x128xf32>
    %c0_3 = arith.constant 0 : index
    %c0_4 = arith.constant 0 : index
    %4 = vector.load %arg3[%c0_3, %c0_4] : memref<1x128xf32, #tpu.memory_space<vmem>>, vector<1x128xf32>
    %5 = vector.broadcast %4 : vector<1x128xf32> to vector<16x128xf32>
    %6 = arith.addf %3, %5 : vector<16x128xf32>
    %cst_5 = arith.constant 0.000000e+00 : f32
    %7 = vector.broadcast %cst_5 : f32 to vector<16x128xf32>
    %8 = arith.maximumf %6, %7 : vector<16x128xf32>
    %9 = arith.truncf %8 : vector<16x128xf32> to vector<16x128xbf16>
    %c0_6 = arith.constant 0 : index
    %c0_7 = arith.constant 0 : index
    %10 = vector.load %arg4[%c0_6, %c0_7] : memref<128x128xbf16, #tpu.memory_space<vmem>>, vector<128x128xbf16>
    %cst_8 = arith.constant dense<0.000000e+00> : vector<16x128xf32>
    %11 = tpu.matmul %9, %10, %cst_8 {dimension_numbers = #tpu.dot_dimension_numbers<[1], [0], [0], [1], [0, 0, 1, 1], [], []>} : vector<16x128xbf16>, vector<128x128xbf16>, vector<16x128xf32> -> vector<16x128xf32>
    %c0_9 = arith.constant 0 : index
    %c0_10 = arith.constant 0 : index
    %12 = vector.load %arg5[%c0_9, %c0_10] : memref<1x128xf32, #tpu.memory_space<vmem>>, vector<1x128xf32>
    %13 = vector.broadcast %12 : vector<1x128xf32> to vector<16x128xf32>
    %14 = arith.addf %11, %13 : vector<16x128xf32>
    %cst_11 = arith.constant 0.000000e+00 : f32
    %15 = vector.broadcast %cst_11 : f32 to vector<16x128xf32>
    %16 = arith.maximumf %14, %15 : vector<16x128xf32>
    %17 = arith.truncf %16 : vector<16x128xf32> to vector<16x128xbf16>
    %c0_12 = arith.constant 0 : index
    %c0_13 = arith.constant 0 : index
    %18 = vector.load %arg6[%c0_12, %c0_13] : memref<128x8xbf16, #tpu.memory_space<vmem>>, vector<128x8xbf16>
    %cst_14 = arith.constant dense<0.000000e+00> : vector<16x8xf32>
    %19 = tpu.matmul %17, %18, %cst_14 {dimension_numbers = #tpu.dot_dimension_numbers<[1], [0], [0], [1], [0, 0, 1, 1], [], []>} : vector<16x128xbf16>, vector<128x8xbf16>, vector<16x8xf32> -> vector<16x8xf32>
    %c0_15 = arith.constant 0 : index
    %c0_16 = arith.constant 0 : index
    %20 = vector.load %arg7[%c0_15, %c0_16] : memref<1x8xf32, #tpu.memory_space<vmem>>, vector<1x8xf32>
    %21 = vector.broadcast %20 : vector<1x8xf32> to vector<16x8xf32>
    %22 = arith.addf %19, %21 : vector<16x8xf32>
    %c0_17 = arith.constant 0 : index
    %c0_18 = arith.constant 0 : index
    %23 = vector.load %arg8[%c0_17, %c0_18] : memref<16x8xf32, #tpu.memory_space<vmem>>, vector<16x8xf32>
    tpu.vector_store %arg8[%c0_17, %c0_18], %22 {strides = array<i32>} : memref<16x8xf32, #tpu.memory_space<vmem>>, vector<16x8xf32>,
    return
  }
  func.func @transform_0(%arg0: i32) -> (i32, i32) {
    %c0_i32 = arith.constant 0 : i32
    %c0_i32_0 = arith.constant 0 : i32
    return %arg0, %c0_i32 : i32, i32
  }
  func.func @transform_1(%arg0: i32) -> (i32, i32) {
    %c0_i32 = arith.constant 0 : i32
    %c0_i32_0 = arith.constant 0 : i32
    %c0_i32_1 = arith.constant 0 : i32
    return %c0_i32, %c0_i32_0 : i32, i32
  }
  func.func @transform_2(%arg0: i32) -> (i32, i32) {
    %c0_i32 = arith.constant 0 : i32
    %c0_i32_0 = arith.constant 0 : i32
    %c0_i32_1 = arith.constant 0 : i32
    return %c0_i32, %c0_i32_0 : i32, i32
  }
  func.func @transform_3(%arg0: i32) -> (i32, i32) {
    %c0_i32 = arith.constant 0 : i32
    %c0_i32_0 = arith.constant 0 : i32
    %c0_i32_1 = arith.constant 0 : i32
    return %c0_i32, %c0_i32_0 : i32, i32
  }
  func.func @transform_4(%arg0: i32) -> (i32, i32) {
    %c0_i32 = arith.constant 0 : i32
    %c0_i32_0 = arith.constant 0 : i32
    %c0_i32_1 = arith.constant 0 : i32
    return %c0_i32, %c0_i32_0 : i32, i32
  }
  func.func @transform_5(%arg0: i32) -> (i32, i32) {
    %c0_i32 = arith.constant 0 : i32
    %c0_i32_0 = arith.constant 0 : i32
    %c0_i32_1 = arith.constant 0 : i32
    return %c0_i32, %c0_i32_0 : i32, i32
  }
  func.func @transform_6(%arg0: i32) -> (i32, i32) {
    %c0_i32 = arith.constant 0 : i32
    %c0_i32_0 = arith.constant 0 : i32
    %c0_i32_1 = arith.constant 0 : i32
    return %c0_i32, %c0_i32_0 : i32, i32
  }
  func.func @transform_7(%arg0: i32) -> (i32, i32) {
    %c0_i32 = arith.constant 0 : i32
    %c0_i32_0 = arith.constant 0 : i32
    return %arg0, %c0_i32 : i32, i32
  }
}

</mosaic_0001>

<llo_original>
// kernel: bc_agent_forward.1
$region0: #{bc_agent_forward.1}
  #allocation0 [shape = 'u32[]', space=smem, size = 0x4, offset = 0x4, fixed_abs, tag = 'smem constant byte address 0x4 - core index']
  #allocation1 [shape = 'u32[144,128]{1,0:T(1,128)}', space=vmem, size = 0x12000, scoped, tag = 'internal scratch']
  %s0 = inlined_call_operand.vmem [shape: f32[16,32], index: 0, kind: input, shape index: {}]
  %s1 = inlined_call_operand.vmem [shape: bf16[32,128], index: 1, kind: input, shape index: {}]
  %s2 = inlined_call_operand.vmem [shape: f32[1,128], index: 2, kind: input, shape index: {}]
  %s3 = inlined_call_operand.vmem [shape: bf16[128,128], index: 3, kind: input, shape index: {}]
  %s4 = inlined_call_operand.vmem [shape: f32[1,128], index: 4, kind: input, shape index: {}]
  %s5 = inlined_call_operand.vmem [shape: bf16[128,8], index: 5, kind: input, shape index: {}]
  %s6 = inlined_call_operand.vmem [shape: f32[1,8], index: 6, kind: input, shape index: {}]
  %s7 = inlined_call_operand.vmem [shape: f32[16,8], index: 7, kind: output, shape index: {}]
  %s8 = sld [smem:[#allocation0]]
  $region38: #{bc_agent_forward.1} parent=0
    _
  %s10 = ssub.s32 1, %s8
  %s11 = scalar_select 0, %s10, %s8
  // Predicated region
  $region2: #{bc_agent_forward.1} parent=0 // pred_check
    _
  $region3: #{bc_agent_forward.1} parent=0 // pred_check_branch
    %13 = sbr.rel (0) target = $region5
  $region4: #{bc_agent_forward.1} parent=0 // pred_region
    _
  $region5: #{bc_agent_forward.1} parent=0 // pred_fallthru
    _
  // Predicated region
  $region6: #{bc_agent_forward.1} parent=0 // pred_check
    _
  $region7: #{bc_agent_forward.1} parent=0 // pred_check_branch
    %15 = sbr.rel (0) target = $region9
  $region8: #{bc_agent_forward.1} parent=0 // pred_region
    _
  $region9: #{bc_agent_forward.1} parent=0 // pred_fallthru
    _
  // Predicated region
  $region10: #{bc_agent_forward.1} parent=0 // pred_check
    _
  $region11: #{bc_agent_forward.1} parent=0 // pred_check_branch
    %17 = sbr.rel (0) target = $region13
  $region12: #{bc_agent_forward.1} parent=0 // pred_region
    _
  $region13: #{bc_agent_forward.1} parent=0 // pred_fallthru
    _
  // Predicated region
  $region14: #{bc_agent_forward.1} parent=0 // pred_check
    _
  $region15: #{bc_agent_forward.1} parent=0 // pred_check_branch
    %19 = sbr.rel (0) target = $region17
  $region16: #{bc_agent_forward.1} parent=0 // pred_region
    _
  $region17: #{bc_agent_forward.1} parent=0 // pred_fallthru
    _
  // Predicated region
  $region18: #{bc_agent_forward.1} parent=0 // pred_check
    _
  $region19: #{bc_agent_forward.1} parent=0 // pred_check_branch
    %21 = sbr.rel (0) target = $region21
  $region20: #{bc_agent_forward.1} parent=0 // pred_region
    _
  $region21: #{bc_agent_forward.1} parent=0 // pred_fallthru
    _
  // Predicated region
  $region22: #{bc_agent_forward.1} parent=0 // pred_check
    _
  $region23: #{bc_agent_forward.1} parent=0 // pred_check_branch
    %23 = sbr.rel (0) target = $region25
  $region24: #{bc_agent_forward.1} parent=0 // pred_region
    _
  $region25: #{bc_agent_forward.1} parent=0 // pred_fallthru
    _
  // Predicated region
  $region26: #{bc_agent_forward.1} parent=0 // pred_check
    _
  $region27: #{bc_agent_forward.1} parent=0 // pred_check_branch
    %25 = sbr.rel (0) target = $region29
  $region28: #{bc_agent_forward.1} parent=0 // pred_region
    _
  $region29: #{bc_agent_forward.1} parent=0 // pred_fallthru
    _
  %v27 = vld [vmem:[%s0] sm:$0xff]
  %v28 = vld [vmem:[%s0 + $0x8] sm:$0xff]
  %v29 = vpack.c.bf16 %v28, %v27
  %v30 = vld [vmem:[%s1] sm:$0xf]
  %v31 = vld [vmem:[%s1 + $0x4] sm:$0xf]
  %v32 = vld [vmem:[%s1 + $0x8] sm:$0xf]
  %v33 = vld [vmem:[%s1 + $0xc] sm:$0xf]
  %v34 = vld [vmem:[%s2] sm:$0x1]
  %v36 = vlaneseq
  %v37 = vshrl.u32 %v36, 7
  %v38 = vsub.s32 0, %v37
  %v39 = vrot.slane %v34, %v38
  %v45 = vunpack.c.l.b16 %v30
  %v46 = vunpack.c.l.b16 %v31
  %v47 = vunpack.c.l.b16 %v32
  %v48 = vunpack.c.l.b16 %v33
  %v49 = vpack.c.b16 %v46, %v45
  %v50 = vpack.c.b16 %v48, %v47
  %vm53 = vcmask 261120
  %v55 = vsel %vm53, %v29, 0
  %57 = vmatprep.subr.bf16.mxu0 0
  %58 = vmatpush1.bf16.msra.mxu0 %v49
  %59 = vmatprep.subr.bf16.mxu0 0
  %60 = vmatpush1.bf16.msra.mxu0 %v50
  %61 = vmatprep.subr.bf16.mxu0 0
  %62 = vmatpush1.bf16.msra.mxu0 0
  %63 = vmatprep.subr.bf16.mxu0 0
  %64 = vmatpush1.bf16.msra.mxu0 0
  %65 = vmatprep.subr.bf16.mxu0 0
  %66 = vmatpush1.bf16.msra.mxu0 0
  %67 = vmatprep.subr.bf16.mxu0 0
  %68 = vmatpush1.bf16.msra.mxu0 0
  %69 = vmatprep.subr.bf16.mxu0 0
  %70 = vmatpush1.bf16.msra.mxu0 0
  %71 = vmatprep.subr.bf16.mxu0 0
  %72 = vmatpush1.bf16.msra.mxu0 0
  %73 = vmatprep.subr.bf16.mxu0 0
  %74 = vmatpush1.bf16.msra.mxu0 0
  %75 = vmatprep.subr.bf16.mxu0 0
  %76 = vmatpush1.bf16.msra.mxu0 0
  %77 = vmatprep.subr.bf16.mxu0 0
  %78 = vmatpush1.bf16.msra.mxu0 0
  %79 = vmatprep.subr.bf16.mxu0 0
  %80 = vmatpush1.bf16.msra.mxu0 0
  %81 = vmatprep.subr.bf16.mxu0 0
  %82 = vmatpush1.bf16.msra.mxu0 0
  %83 = vmatprep.subr.bf16.mxu0 0
  %84 = vmatpush1.bf16.msra.mxu0 0
  %85 = vmatprep.subr.bf16.mxu0 0
  %86 = vmatpush1.bf16.msra.mxu0 0
  %87 = vmatprep.subr.bf16.mxu0 0
  %88 = vmatpush1.bf16.msra.mxu0 0
  %89 = vmatprep.mubr.bf16.mxu0 0
  %90 = vmatmul.mubr.bf16.gmra.mrb[0].mxu0 %v55
  %v91 = vpop.f32.mrb[0].mxu0
  %v92 = vadd.f32 %v39, %v91
  %v93 = vpop.f32.mrb[0].mxu0
  %v94 = vpop.f32.mrb[0].mxu0
  %v95 = vadd.f32 %v39, %v94
  %v96 = vpop.f32.mrb[0].mxu0
  %97 = vdwg.mxu0
  %v98 = vmax.f32 %v92, 0.0
  %v99 = vmax.f32 %v95, 0.0
  %v100 = vpack.c.bf16 %v99, %v98
  %v101 = vld [vmem:[%s3] sm:$0xf]
  %v102 = vld [vmem:[%s3 + $0x4] sm:$0xf]
  %v103 = vld [vmem:[%s3 + $0x8] sm:$0xf]
  %v104 = vld [vmem:[%s3 + $0xc] sm:$0xf]
  %v105 = vld [vmem:[%s3 + $0x10] sm:$0xf]
  %v106 = vld [vmem:[%s3 + $0x14] sm:$0xf]
  %v107 = vld [vmem:[%s3 + $0x18] sm:$0xf]
  %v108 = vld [vmem:[%s3 + $0x1c] sm:$0xf]
  %v109 = vld [vmem:[%s3 + $0x20] sm:$0xf]
  %v110 = vld [vmem:[%s3 + $0x24] sm:$0xf]
  %v111 = vld [vmem:[%s3 + $0x28] sm:$0xf]
  %v112 = vld [vmem:[%s3 + $0x2c] sm:$0xf]
  %v113 = vld [vmem:[%s3 + $0x30] sm:$0xf]
  %v114 = vld [vmem:[%s3 + $0x34] sm:$0xf]
  %v115 = vld [vmem:[%s3 + $0x38] sm:$0xf]
  %v116 = vld [vmem:[%s3 + $0x3c] sm:$0xf]
  %v117 = vld [vmem:[%s4] sm:$0x1]
  %v119 = vlaneseq
  %v120 = vshrl.u32 %v119, 7
  %v121 = vsub.s32 0, %v120
  %v122 = vrot.slane %v117, %v121
  %v140 = vunpack.c.l.b16 %v101
  %v141 = vunpack.c.l.b16 %v102
  %v142 = vunpack.c.l.b16 %v103
  %v143 = vunpack.c.l.b16 %v104
  %v144 = vunpack.c.l.b16 %v105
  %v145 = vunpack.c.l.b16 %v106
  %v146 = vunpack.c.l.b16 %v107
  %v147 = vunpack.c.l.b16 %v108
  %v148 = vunpack.c.l.b16 %v109
  %v149 = vunpack.c.l.b16 %v110
  %v150 = vunpack.c.l.b16 %v111
  %v151 = vunpack.c.l.b16 %v112
  %v152 = vunpack.c.l.b16 %v113
  %v153 = vunpack.c.l.b16 %v114
  %v154 = vunpack.c.l.b16 %v115
  %v155 = vunpack.c.l.b16 %v116
  %v156 = vpack.c.b16 %v141, %v140
  %v157 = vpack.c.b16 %v143, %v142
  %v158 = vpack.c.b16 %v145, %v144
  %v159 = vpack.c.b16 %v147, %v146
  %v160 = vpack.c.b16 %v149, %v148
  %v161 = vpack.c.b16 %v151, %v150
  %v162 = vpack.c.b16 %v153, %v152
  %v163 = vpack.c.b16 %v155, %v154
  %172 = vmatprep.subr.bf16.mxu0 0
  %173 = vmatpush1.bf16.msra.mxu0 %v156
  %174 = vmatprep.subr.bf16.mxu0 0
  %175 = vmatpush1.bf16.msra.mxu0 %v157
  %176 = vmatprep.subr.bf16.mxu0 0
  %177 = vmatpush1.bf16.msra.mxu0 %v158
  %178 = vmatprep.subr.bf16.mxu0 0
  %179 = vmatpush1.bf16.msra.mxu0 %v159
  %180 = vmatprep.subr.bf16.mxu0 0
  %181 = vmatpush1.bf16.msra.mxu0 %v160
  %182 = vmatprep.subr.bf16.mxu0 0
  %183 = vmatpush1.bf16.msra.mxu0 %v161
  %184 = vmatprep.subr.bf16.mxu0 0
  %185 = vmatpush1.bf16.msra.mxu0 %v162
  %186 = vmatprep.subr.bf16.mxu0 0
  %187 = vmatpush1.bf16.msra.mxu0 %v163
  %188 = vmatprep.subr.bf16.mxu0 0
  %189 = vmatpush1.bf16.msra.mxu0 0
  %190 = vmatprep.subr.bf16.mxu0 0
  %191 = vmatpush1.bf16.msra.mxu0 0
  %192 = vmatprep.subr.bf16.mxu0 0
  %193 = vmatpush1.bf16.msra.mxu0 0
  %194 = vmatprep.subr.bf16.mxu0 0
  %195 = vmatpush1.bf16.msra.mxu0 0
  %196 = vmatprep.subr.bf16.mxu0 0
  %197 = vmatpush1.bf16.msra.mxu0 0
  %198 = vmatprep.subr.bf16.mxu0 0
  %199 = vmatpush1.bf16.msra.mxu0 0
  %200 = vmatprep.subr.bf16.mxu0 0
  %201 = vmatpush1.bf16.msra.mxu0 0
  %202 = vmatprep.subr.bf16.mxu0 0
  %203 = vmatpush1.bf16.msra.mxu0 0
  %204 = vmatprep.mubr.bf16.mxu0 0
  %205 = vmatmul.mubr.bf16.gmra.mrb[0].mxu0 %v100
  %v206 = vpop.f32.mrb[0].mxu0
  %v207 = vadd.f32 %v122, %v206
  %v208 = vpop.f32.mrb[0].mxu0
  %v209 = vpop.f32.mrb[0].mxu0
  %v210 = vadd.f32 %v122, %v209
  %v211 = vpop.f32.mrb[0].mxu0
  %212 = vdwg.mxu0
  %v213 = vmax.f32 %v207, 0.0
  %v214 = vmax.f32 %v210, 0.0
  %v215 = vpack.c.bf16 %v214, %v213
  %v216 = vld [vmem:[%s5] sm:$0xf]
  %v217 = vld [vmem:[%s5 + $0x4] sm:$0xf]
  %v218 = vld [vmem:[%s5 + $0x8] sm:$0xf]
  %v219 = vld [vmem:[%s5 + $0xc] sm:$0xf]
  %v220 = vld [vmem:[%s5 + $0x10] sm:$0xf]
  %v221 = vld [vmem:[%s5 + $0x14] sm:$0xf]
  %v222 = vld [vmem:[%s5 + $0x18] sm:$0xf]
  %v223 = vld [vmem:[%s5 + $0x1c] sm:$0xf]
  %v224 = vld [vmem:[%s5 + $0x20] sm:$0xf]
  %v225 = vld [vmem:[%s5 + $0x24] sm:$0xf]
  %v226 = vld [vmem:[%s5 + $0x28] sm:$0xf]
  %v227 = vld [vmem:[%s5 + $0x2c] sm:$0xf]
  %v228 = vld [vmem:[%s5 + $0x30] sm:$0xf]
  %v229 = vld [vmem:[%s5 + $0x34] sm:$0xf]
  %v230 = vld [vmem:[%s5 + $0x38] sm:$0xf]
  %v231 = vld [vmem:[%s5 + $0x3c] sm:$0xf]
  %v232 = vld [vmem:[%s6] sm:$0x1]
  %v234 = vlaneseq
  %v235 = vshrl.u32 %v234, 7
  %v236 = vsub.s32 0, %v235
  %v237 = vrot.slane %v232, %v236
  %v255 = vunpack.c.l.b16 %v216
  %v256 = vunpack.c.l.b16 %v217
  %v257 = vunpack.c.l.b16 %v218
  %v258 = vunpack.c.l.b16 %v219
  %v259 = vunpack.c.l.b16 %v220
  %v260 = vunpack.c.l.b16 %v221
  %v261 = vunpack.c.l.b16 %v222
  %v262 = vunpack.c.l.b16 %v223
  %v263 = vunpack.c.l.b16 %v224
  %v264 = vunpack.c.l.b16 %v225
  %v265 = vunpack.c.l.b16 %v226
  %v266 = vunpack.c.l.b16 %v227
  %v267 = vunpack.c.l.b16 %v228
  %v268 = vunpack.c.l.b16 %v229
  %v269 = vunpack.c.l.b16 %v230
  %v270 = vunpack.c.l.b16 %v231
  %v271 = vpack.c.b16 %v256, %v255
  %v272 = vpack.c.b16 %v258, %v257
  %v273 = vpack.c.b16 %v260, %v259
  %v274 = vpack.c.b16 %v262, %v261
  %v275 = vpack.c.b16 %v264, %v263
  %v276 = vpack.c.b16 %v266, %v265
  %v277 = vpack.c.b16 %v268, %v267
  %v278 = vpack.c.b16 %v270, %v269
  %287 = vmatprep.subr.bf16.mxu0 0
  %288 = vmatpush1.bf16.msra.mxu0 %v271
  %289 = vmatprep.subr.bf16.mxu0 0
  %290 = vmatpush1.bf16.msra.mxu0 %v272
  %291 = vmatprep.subr.bf16.mxu0 0
  %292 = vmatpush1.bf16.msra.mxu0 %v273
  %293 = vmatprep.subr.bf16.mxu0 0
  %294 = vmatpush1.bf16.msra.mxu0 %v274
  %295 = vmatprep.subr.bf16.mxu0 0
  %296 = vmatpush1.bf16.msra.mxu0 %v275
  %297 = vmatprep.subr.bf16.mxu0 0
  %298 = vmatpush1.bf16.msra.mxu0 %v276
  %299 = vmatprep.subr.bf16.mxu0 0
  %300 = vmatpush1.bf16.msra.mxu0 %v277
  %301 = vmatprep.subr.bf16.mxu0 0
  %302 = vmatpush1.bf16.msra.mxu0 %v278
  %303 = vmatprep.subr.bf16.mxu0 0
  %304 = vmatpush1.bf16.msra.mxu0 0
  %305 = vmatprep.subr.bf16.mxu0 0
  %306 = vmatpush1.bf16.msra.mxu0 0
  %307 = vmatprep.subr.bf16.mxu0 0
  %308 = vmatpush1.bf16.msra.mxu0 0
  %309 = vmatprep.subr.bf16.mxu0 0
  %310 = vmatpush1.bf16.msra.mxu0 0
  %311 = vmatprep.subr.bf16.mxu0 0
  %312 = vmatpush1.bf16.msra.mxu0 0
  %313 = vmatprep.subr.bf16.mxu0 0
  %314 = vmatpush1.bf16.msra.mxu0 0
  %315 = vmatprep.subr.bf16.mxu0 0
  %316 = vmatpush1.bf16.msra.mxu0 0
  %317 = vmatprep.subr.bf16.mxu0 0
  %318 = vmatpush1.bf16.msra.mxu0 0
  %319 = vmatprep.mubr.bf16.mxu0 0
  %320 = vmatmul.mubr.bf16.gmra.mrb[0].mxu0 %v215
  %v321 = vpop.f32.mrb[0].mxu0
  %v322 = vadd.f32 %v237, %v321
  %v323 = vpop.f32.mrb[0].mxu0
  %v324 = vpop.f32.mrb[0].mxu0
  %v325 = vadd.f32 %v237, %v324
  %v326 = vpop.f32.mrb[0].mxu0
  %327 = vdwg.mxu0
  %vm328 = vcmask 64512
  %329 = vst.msk [vmem:[%s7] sm:$0xff] %vm328, %v322
  %330 = vst.msk [vmem:[%s7 + $0x8] sm:$0xff] %vm328, %v325
  // Predicated region
  $region30: #{bc_agent_forward.1} parent=0 // pred_check
    _
  $region31: #{bc_agent_forward.1} parent=0 // pred_check_branch
    %332 = sbr.rel (0) target = $region33
  $region32: #{bc_agent_forward.1} parent=0 // pred_region
    _
  $region33: #{bc_agent_forward.1} parent=0 // pred_fallthru
    _
  // Predicated region
  $region34: #{bc_agent_forward.1} parent=0 // pred_check
    _
  $region35: #{bc_agent_forward.1} parent=0 // pred_check_branch
    %334 = sbr.rel (0) target = $region37
  $region36: #{bc_agent_forward.1} parent=0 // pred_region
    _
  $region37: #{bc_agent_forward.1} parent=0 // pred_fallthru
    _

</llo_original>
